<compile_context>
chip_gen: v7x
topology: tpu7x:2x2x1
jax: 0.10.0
libtpu: 0.0.40
codegen_flags: <defaults>
</compile_context>

<pallas_src>
import jax
import jax.numpy as jnp
import numpy as np
from jax.experimental import pallas as pl
from jax.experimental.pallas import tpu as pltpu


# ------------------------- config (synthetic) -------------------------------
B = 2            # batch
S = 8            # seq len
IN = 48          # input_size (backbone output dim fed to the decoder)
BH = 32          # backbone_hidden_size
DH = BH // 2     # decoder_hidden_size (decoder_shrink = True)
HEAD_SIZES = (2, 3, 3, 3, 3)   # line_extraction, ent_h2h, ent_t2t, grp_h2h, grp_t2t
C_TOT = sum(HEAD_SIZES)        # 14

LANE = 128       # padded classifier width (lane-dense output)

# packed-parameter slab layout (all weight-block row starts are multiples of 8)
R_WP1 = 0                  # (IN, BH)   rows   0:48,  cols 0:BH
R_WP2 = R_WP1 + IN         # (BH, DH)   rows  48:80,  cols 0:DH
R_WC = R_WP2 + BH          # (DH, 2DH)  rows  80:96,  cols 0:2*DH   [W_i | W_j]
R_WCLS = R_WC + DH         # (DH, 128)  rows  96:112, cols C_TOT.. zero-padded
R_BIAS = R_WCLS + DH       # 8-row bias block, rows 112:120
W_ROWS = R_BIAS + 8        # 120 (multiple of 8)


def _silu(x):
    return x * jax.nn.sigmoid(x)


# ------------------------------ Pallas kernel --------------------------------
def peneo_kernel(x_ref, w_ref, out_ref):
    x = x_ref[...]                                            # (B*S, IN)

    # static, sublane-aligned row slices of the single packed weight slab
    wp1 = w_ref[R_WP1:R_WP1 + IN, :][:, :BH]                  # (IN, BH)
    wp2 = w_ref[R_WP2:R_WP2 + BH, :][:, :DH]                  # (BH, DH)
    wc = w_ref[R_WC:R_WC + DH, :][:, :2 * DH]                 # (DH, 2*DH)
    wcls = w_ref[R_WCLS:R_WCLS + DH, :]                       # (DH, LANE)
    bias_blk = w_ref[R_BIAS:R_BIAS + 8, :]                    # (8, LANE)
    bp1 = bias_blk[0:1, :BH]
    bp2 = bias_blk[1:2, :DH]
    bc = bias_blk[2:3, :DH]
    bcls = bias_blk[3:4, :]                                   # (1, LANE)

    # shrink_projection: Linear -> SiLU -> (Dropout=id) -> Linear -> SiLU
    h1 = _silu(jnp.dot(x, wp1, preferred_element_type=jnp.float32) + bp1)   # (B*S, BH)
    h = _silu(jnp.dot(h1, wp2, preferred_element_type=jnp.float32) + bp2)   # (B*S, DH)

    # HandshakingKernel combine_fc, both halves of the concat in one matmul:
    #   pc[:, :DH] = h @ W_i,  pc[:, DH:] = h @ W_j
    pc = jnp.dot(h, wc, preferred_element_type=jnp.float32)   # (B*S, 2*DH)
    pi = pc[:, :DH].reshape(B, S, DH)
    pj = (pc[:, DH:] + bc).reshape(B, S, DH)

    # full pairwise shaking matrix: shaking[b,i,j] = SiLU(h_i@W_i + h_j@W_j + b)
    shaking = _silu(pi[:, :, None, :] + pj[:, None, :, :])    # (B, S, S, DH)
    shaking2d = shaking.reshape(B * S * S, DH)                # (B*S*S, DH)

    # five classifiers fused into one lane-dense (DH -> 128) matmul
    out_ref[...] = (jnp.dot(shaking2d, wcls, preferred_element_type=jnp.float32)
                    + bcls)                                   # (B*S*S, LANE)


# ------------------------------ param packing --------------------------------
def pack_params(params):
    """Pack all 9 decoder parameters into one (W_ROWS, 128) f32 slab (1 DMA)."""
    wp1, bp1, wp2, bp2, wci, wcj, bc, wcls, bcls = [np.asarray(p) for p in params]
    slab = np.zeros((W_ROWS, LANE), np.float32)
    slab[R_WP1:R_WP1 + IN, :BH] = wp1
    slab[R_WP2:R_WP2 + BH, :DH] = wp2
    slab[R_WC:R_WC + DH, :DH] = wci            # left half of concat  -> h_i
    slab[R_WC:R_WC + DH, DH:2 * DH] = wcj      # right half of concat -> h_j
    slab[R_WCLS:R_WCLS + DH, :C_TOT] = wcls    # cols C_TOT..128 stay zero
    slab[R_BIAS + 0, :BH] = bp1.reshape(-1)
    slab[R_BIAS + 1, :DH] = bp2.reshape(-1)
    slab[R_BIAS + 2, :DH] = bc.reshape(-1)
    slab[R_BIAS + 3, :C_TOT] = bcls.reshape(-1)
    return jnp.asarray(slab)


# ------------------------------ wrapper ---------------------------------------
@jax.jit
def peneo_decoder_pallas(sequence_output, w_slab, orig_bbox):
    x_flat = sequence_output.reshape(B * S, IN)

    grid_spec = pltpu.PrefetchScalarGridSpec(
        num_scalar_prefetch=0,
        grid=(1,),
        in_specs=[
            pl.BlockSpec((B * S, IN), lambda g: (0, 0)),
            pl.BlockSpec((W_ROWS, LANE), lambda g: (0, 0)),
        ],
        out_specs=pl.BlockSpec((B * S * S, LANE), lambda g: (0, 0)),
    )

    out2d = pl.pallas_call(
        peneo_kernel,
        out_shape=jax.ShapeDtypeStruct((B * S * S, LANE), jnp.float32),
        grid_spec=grid_spec,
        compiler_params=pltpu.CompilerParams(
            dimension_semantics=("arbitrary",)),
    )(x_flat, w_slab)

    out_full = out2d.reshape(B, S, S, LANE)

    # flatten upper triangle (i <= j), row-major, drop the zero lane padding
    ii, jj = jnp.triu_indices(S)
    out_triu = out_full[:, ii, jj, :C_TOT]                    # (B, K, C_TOT)

    # split back into the five heads (inference-mode return order)
    splits = np.cumsum(HEAD_SIZES)[:-1].tolist()
    (line_extraction, ent_linking_h2h, ent_linking_t2t,
     line_grouping_h2h, line_grouping_t2t) = jnp.split(out_triu, splits, axis=-1)

    return (line_extraction, ent_linking_h2h, ent_linking_t2t,
            line_grouping_h2h, line_grouping_t2t, orig_bbox)


# ------------------------------ pure-JAX reference ---------------------------
def peneo_decoder_ref(sequence_output, params):
    (wp1, bp1, wp2, bp2, wci, wcj, bc, wcls, bcls) = params
    h1 = _silu(sequence_output @ wp1 + bp1)
    h = _silu(h1 @ wp2 + bp2)
    # replicate HandshakingKernel exactly: concat(h_i, h_j) for all (i, j)
    hi = jnp.repeat(h[:, :, None, :], S, axis=2)       # (B, S, S, DH) -> h_i
    hj = jnp.repeat(h[:, None, :, :], S, axis=1)       # (B, S, S, DH) -> h_j
    cat = jnp.concatenate([hi, hj], axis=-1)           # (B, S, S, 2*DH)
    w_comb = jnp.concatenate([wci, wcj], axis=0)       # (2*DH, DH)
    shaking = _silu(cat @ w_comb + bc)                 # (B, S, S, DH)
    ii, jj = jnp.triu_indices(S)
    shaking = shaking[:, ii, jj, :]                    # (B, K, DH)
    logits = shaking @ wcls + bcls                     # (B, K, C_TOT)
    splits = np.cumsum(HEAD_SIZES)[:-1].tolist()
    return jnp.split(logits, splits, axis=-1)


# --------------------------------- main ---------------------------------------
if __name__ == "__main__":
    key = jax.random.PRNGKey(0)
    ks = jax.random.split(key, 12)

    def init(k, shape, scale=0.05):
        return (scale * jax.random.normal(k, shape)).astype(jnp.float32)

    # deterministic synthetic parameters (stored pre-transposed: (in, out))
    wp1 = init(ks[0], (IN, BH))            # shrink Linear 1
    bp1 = init(ks[1], (1, BH))
    wp2 = init(ks[2], (BH, DH))            # shrink Linear 2
    bp2 = init(ks[3], (1, DH))
    wci = init(ks[4], (DH, DH))            # combine_fc, left half of concat (h_i)
    wcj = init(ks[5], (DH, DH))            # combine_fc, right half of concat (h_j)
    bc = init(ks[6], (1, DH))
    wcls = init(ks[7], (DH, C_TOT))        # five heads fused: 2+3+3+3+3
    bcls = init(ks[8], (1, C_TOT))
    params = (wp1, bp1, wp2, bp2, wci, wcj, bc, wcls, bcls)

    sequence_output = jax.random.normal(ks[9], (B, S, IN), dtype=jnp.float32)
    orig_bbox = jax.random.randint(ks[10], (B, S, 4), 0, 1000).astype(jnp.int32)

    # pack the decoder parameters once (load-time cost, single DMA at run time)
    w_slab = pack_params(params)

    outs = peneo_decoder_pallas(sequence_output, w_slab, orig_bbox)
    outs = jax.block_until_ready(outs)

    ref_outs = peneo_decoder_ref(sequence_output, params)

    K = S * (S + 1) // 2
    for got, want, c in zip(outs[:5], ref_outs, HEAD_SIZES):
        assert got.shape == (B, K, c), got.shape
        np.testing.assert_allclose(np.asarray(got), np.asarray(want),
                                   rtol=1e-5, atol=1e-5)
    assert outs[5].shape == (B, S, 4)

    # TODO(synk): training-mode losses (CrossEntropyLossOHEM) not implemented;
    # only the inference-mode forward path is reproduced.
    print("KERNEL_OK")
</pallas_src>

<mosaic_0001>
module attributes {stable_mosaic.version = 11 : i64} {
  func.func private @main(%arg0: i32) attributes {dimension_semantics = [#tpu.dimension_semantics<core_parallel>], iteration_bounds = array<i64: 2>, tpu.core_type = #tpu.core_type<sc_scalar_subcore>, window_params = []} {
    return
  }
}

module attributes {stable_mosaic.version = 11 : i64} {
  func.func private @main(%arg0: i32) attributes {dimension_semantics = [#tpu.dimension_semantics<core_parallel>], iteration_bounds = array<i64: 2>, tpu.core_type = #tpu.core_type<sc_scalar_subcore>, window_params = []} {
    return
  }
}

module attributes {stable_mosaic.version = 11 : i64} {
  func.func @peneo_kernel(%arg0: i32, %arg1: memref<16x48xf32, #tpu.memory_space<vmem>>, %arg2: memref<120x128xf32, #tpu.memory_space<vmem>>, %arg3: memref<128x128xf32, #tpu.memory_space<vmem>>) attributes {dimension_semantics = [#tpu.dimension_semantics<arbitrary>], iteration_bounds = array<i64: 1>, scalar_prefetch = 0 : i64, scratch_operands = 0 : i64, tpu.core_type = #tpu.core_type<tc>, window_params = [{pipeline_mode = #tpu.pipeline_mode<synchronous>, transform_indices = @transform_0, window_bounds = array<i64: 16, 48>}, {pipeline_mode = #tpu.pipeline_mode<synchronous>, transform_indices = @transform_1, window_bounds = array<i64: 120, 128>}, {pipeline_mode = #tpu.pipeline_mode<synchronous>, transform_indices = @transform_2, window_bounds = array<i64: 128, 128>}]} {
    %c0 = arith.constant 0 : index
    %c0_0 = arith.constant 0 : index
    %0 = vector.load %arg1[%c0, %c0_0] : memref<16x48xf32, #tpu.memory_space<vmem>>, vector<16x48xf32>
    %c0_1 = arith.constant 0 : index
    %c0_2 = arith.constant 0 : index
    %1 = vector.load %arg2[%c0_1, %c0_2] : memref<120x128xf32, #tpu.memory_space<vmem>>, vector<48x128xf32>
    %2 = vector.extract_strided_slice %1 {offsets = [0, 0], sizes = [48, 32], strides = [1, 1]} : vector<48x128xf32> to vector<48x32xf32>
    %c48 = arith.constant 48 : index
    %c0_3 = arith.constant 0 : index
    %3 = vector.load %arg2[%c48, %c0_3] : memref<120x128xf32, #tpu.memory_space<vmem>>, vector<32x128xf32>
    %4 = vector.extract_strided_slice %3 {offsets = [0, 0], sizes = [32, 16], strides = [1, 1]} : vector<32x128xf32> to vector<32x16xf32>
    %c80 = arith.constant 80 : index
    %c0_4 = arith.constant 0 : index
    %5 = vector.load %arg2[%c80, %c0_4] : memref<120x128xf32, #tpu.memory_space<vmem>>, vector<16x128xf32>
    %6 = vector.extract_strided_slice %5 {offsets = [0, 0], sizes = [16, 32], strides = [1, 1]} : vector<16x128xf32> to vector<16x32xf32>
    %c96 = arith.constant 96 : index
    %c0_5 = arith.constant 0 : index
    %7 = vector.load %arg2[%c96, %c0_5] : memref<120x128xf32, #tpu.memory_space<vmem>>, vector<16x128xf32>
    %c112 = arith.constant 112 : index
    %c0_6 = arith.constant 0 : index
    %8 = vector.load %arg2[%c112, %c0_6] : memref<120x128xf32, #tpu.memory_space<vmem>>, vector<8x128xf32>
    %9 = vector.extract_strided_slice %8 {offsets = [0, 0], sizes = [1, 32], strides = [1, 1]} : vector<8x128xf32> to vector<1x32xf32>
    %10 = vector.extract_strided_slice %8 {offsets = [1, 0], sizes = [1, 16], strides = [1, 1]} : vector<8x128xf32> to vector<1x16xf32>
    %11 = vector.extract_strided_slice %8 {offsets = [2, 0], sizes = [1, 16], strides = [1, 1]} : vector<8x128xf32> to vector<1x16xf32>
    %12 = vector.extract_strided_slice %8 {offsets = [3, 0], sizes = [1, 128], strides = [1, 1]} : vector<8x128xf32> to vector<1x128xf32>
    %cst = arith.constant dense<0.000000e+00> : vector<16x32xf32>
    %13 = tpu.matmul %0, %2, %cst {dimension_numbers = #tpu.dot_dimension_numbers<[1], [0], [0], [1], [0, 0, 1, 1], [], []>} : vector<16x48xf32>, vector<48x32xf32>, vector<16x32xf32> -> vector<16x32xf32>
    %14 = vector.broadcast %9 : vector<1x32xf32> to vector<16x32xf32>
    %15 = arith.addf %13, %14 : vector<16x32xf32>
    %16 = arith.negf %15 : vector<16x32xf32>
    %17 = math.exp %16 : vector<16x32xf32>
    %cst_7 = arith.constant 1.000000e+00 : f32
    %18 = vector.broadcast %cst_7 : f32 to vector<16x32xf32>
    %19 = arith.addf %18, %17 : vector<16x32xf32>
    %20 = arith.divf %18, %19 : vector<16x32xf32>
    %21 = arith.mulf %15, %20 : vector<16x32xf32>
    %cst_8 = arith.constant dense<0.000000e+00> : vector<16x16xf32>
    %22 = tpu.matmul %21, %4, %cst_8 {dimension_numbers = #tpu.dot_dimension_numbers<[1], [0], [0], [1], [0, 0, 1, 1], [], []>} : vector<16x32xf32>, vector<32x16xf32>, vector<16x16xf32> -> vector<16x16xf32>
    %23 = vector.broadcast %10 : vector<1x16xf32> to vector<16x16xf32>
    %24 = arith.addf %22, %23 : vector<16x16xf32>
    %25 = arith.negf %24 : vector<16x16xf32>
    %26 = math.exp %25 : vector<16x16xf32>
    %cst_9 = arith.constant 1.000000e+00 : f32
    %27 = vector.broadcast %cst_9 : f32 to vector<16x16xf32>
    %28 = arith.addf %27, %26 : vector<16x16xf32>
    %29 = arith.divf %27, %28 : vector<16x16xf32>
    %30 = arith.mulf %24, %29 : vector<16x16xf32>
    %cst_10 = arith.constant dense<0.000000e+00> : vector<16x32xf32>
    %31 = tpu.matmul %30, %6, %cst_10 {dimension_numbers = #tpu.dot_dimension_numbers<[1], [0], [0], [1], [0, 0, 1, 1], [], []>} : vector<16x16xf32>, vector<16x32xf32>, vector<16x32xf32> -> vector<16x32xf32>
    %32 = vector.extract_strided_slice %31 {offsets = [0, 0], sizes = [16, 16], strides = [1, 1]} : vector<16x32xf32> to vector<16x16xf32>
    %33 = vector.shape_cast %32 : vector<16x16xf32> to vector<2x8x16xf32>
    %34 = vector.extract_strided_slice %31 {offsets = [0, 16], sizes = [16, 16], strides = [1, 1]} : vector<16x32xf32> to vector<16x16xf32>
    %35 = vector.broadcast %11 : vector<1x16xf32> to vector<16x16xf32>
    %36 = arith.addf %34, %35 : vector<16x16xf32>
    %37 = vector.shape_cast %36 : vector<16x16xf32> to vector<2x8x16xf32>
    %38 = vector.shape_cast %33 : vector<2x8x16xf32> to vector<2x8x1x16xf32>
    %39 = vector.shape_cast %37 : vector<2x8x16xf32> to vector<2x1x8x16xf32>
    %40 = vector.broadcast %38 : vector<2x8x1x16xf32> to vector<2x8x8x16xf32>
    %41 = vector.broadcast %39 : vector<2x1x8x16xf32> to vector<2x8x8x16xf32>
    %42 = arith.addf %40, %41 : vector<2x8x8x16xf32>
    %43 = arith.negf %42 : vector<2x8x8x16xf32>
    %44 = math.exp %43 : vector<2x8x8x16xf32>
    %cst_11 = arith.constant 1.000000e+00 : f32
    %45 = vector.broadcast %cst_11 : f32 to vector<2x8x8x16xf32>
    %46 = arith.addf %45, %44 : vector<2x8x8x16xf32>
    %47 = arith.divf %45, %46 : vector<2x8x8x16xf32>
    %48 = arith.mulf %42, %47 : vector<2x8x8x16xf32>
    %49 = vector.shape_cast %48 : vector<2x8x8x16xf32> to vector<128x16xf32>
    %cst_12 = arith.constant dense<0.000000e+00> : vector<128x128xf32>
    %50 = tpu.matmul %49, %7, %cst_12 {dimension_numbers = #tpu.dot_dimension_numbers<[1], [0], [0], [1], [0, 0, 1, 1], [], []>} : vector<128x16xf32>, vector<16x128xf32>, vector<128x128xf32> -> vector<128x128xf32>
    %51 = vector.broadcast %12 : vector<1x128xf32> to vector<128x128xf32>
    %52 = arith.addf %50, %51 : vector<128x128xf32>
    %c0_13 = arith.constant 0 : index
    %c0_14 = arith.constant 0 : index
    %53 = vector.load %arg3[%c0_13, %c0_14] : memref<128x128xf32, #tpu.memory_space<vmem>>, vector<128x128xf32>
    tpu.vector_store %arg3[%c0_13, %c0_14], %52 {strides = array<i32>} : memref<128x128xf32, #tpu.memory_space<vmem>>, vector<128x128xf32>,
    return
  }
  func.func @transform_0(%arg0: i32) -> (i32, i32) {
    %c0_i32 = arith.constant 0 : i32
    %c0_i32_0 = arith.constant 0 : i32
    %c0_i32_1 = arith.constant 0 : i32
    return %c0_i32, %c0_i32_0 : i32, i32
  }
  func.func @transform_1(%arg0: i32) -> (i32, i32) {
    %c0_i32 = arith.constant 0 : i32
    %c0_i32_0 = arith.constant 0 : i32
    %c0_i32_1 = arith.constant 0 : i32
    return %c0_i32, %c0_i32_0 : i32, i32
  }
  func.func @transform_2(%arg0: i32) -> (i32, i32) {
    %c0_i32 = arith.constant 0 : i32
    %c0_i32_0 = arith.constant 0 : i32
    %c0_i32_1 = arith.constant 0 : i32
    return %c0_i32, %c0_i32_0 : i32, i32
  }
}

</mosaic_0001>

<llo_original>
// kernel: peneo_decoder_pallas.1
$region0: #{peneo_decoder_pallas.1}
  #allocation0 [shape = 'u32[]', space=smem, size = 0x4, offset = 0x4, fixed_abs, tag = 'smem constant byte address 0x4 - core index']
  #allocation1 [shape = 'u32[144,128]{1,0:T(1,128)}', space=vmem, size = 0x12000, scoped, tag = 'internal scratch']
  %s0 = inlined_call_operand.hbm [shape: f32[16,48], index: 0, kind: input, shape index: {}]
  %s1 = inlined_call_operand.hbm [shape: f32[120,128], index: 1, kind: input, shape index: {}]
  %s2 = inlined_call_operand.vmem [shape: f32[128,128], index: 2, kind: output, shape index: {}]
  %s3 = sld [smem:[#allocation0]]
  $region26: #{peneo_decoder_pallas.1} parent=0
    _
  %s5 = ssub.s32 1, %s3
  %s6 = scalar_select 0, %s5, %s3
  $region1: #{peneo_decoder_pallas.1} parent=0
    #allocation2 [shape = 'u8[8192]{0}', space=vmem, size = 0x2000, scoped, tag = 'input window, operand 0, single buffered']
    #allocation3 [shape = 's32[1]{0}', space=sflag, size = 0x4, scoped, tag = 'scoped memory for peneo_decoder_pallas.1']
    #allocation4 [shape = 'u8[61440]{0}', space=vmem, size = 0xf000, scoped, tag = 'input window, operand 1, single buffered']
    #allocation5 [shape = 's32[1]{0}', space=sflag, size = 0x4, scoped, tag = 'scoped memory for peneo_decoder_pallas.1']
    %7 = vsyncpa [#allocation3], 0
    %8 = vsyncpa [#allocation5], 0
    // Predicated region
    $region2: #{peneo_decoder_pallas.1} parent=1 // pred_check
      _
    $region3: #{peneo_decoder_pallas.1} parent=1 // pred_check_branch
      %10 = sbr.rel (0) target = $region5
    $region4: #{peneo_decoder_pallas.1} parent=1 // pred_region
      %s12 = ssub.s32 256, 256
      %13 = vsyncadd [#allocation3], %s12
      %s14 = sshll.u32 [#allocation2], 4
      %s15 = int_to_ptr.vmem [resolvable:$true] %s14
      %20 = dma.hbm_to_vmem [thread:$0]  %s0, 256, %s15, [#allocation3], 128, 128, 8
    $region5: #{peneo_decoder_pallas.1} parent=1 // pred_fallthru
      _
    // Predicated region
    $region6: #{peneo_decoder_pallas.1} parent=1 // pred_check
      _
    $region7: #{peneo_decoder_pallas.1} parent=1 // pred_check_branch
      %22 = sbr.rel (0) target = $region9
    $region8: #{peneo_decoder_pallas.1} parent=1 // pred_region
      %s24 = ssub.s32 1920, 1920
      %25 = vsyncadd [#allocation5], %s24
      %s26 = sshll.u32 [#allocation4], 4
      %s27 = int_to_ptr.vmem [resolvable:$true] %s26
      %32 = dma.hbm_to_vmem [thread:$0]  %s1, 1920, %s27, [#allocation5], 128, 128, 8
    $region9: #{peneo_decoder_pallas.1} parent=1 // pred_fallthru
      _
    // Predicated region
    $region10: #{peneo_decoder_pallas.1} parent=1 // pred_check
      _
    $region11: #{peneo_decoder_pallas.1} parent=1 // pred_check_branch
      %34 = sbr.rel (0) target = $region13
    $region12: #{peneo_decoder_pallas.1} parent=1 // pred_region
      %35 = dma.done [#allocation3], 256
    $region13: #{peneo_decoder_pallas.1} parent=1 // pred_fallthru
      _
    // Predicated region
    $region14: #{peneo_decoder_pallas.1} parent=1 // pred_check
      _
    $region15: #{peneo_decoder_pallas.1} parent=1 // pred_check_branch
      %37 = sbr.rel (0) target = $region17
    $region16: #{peneo_decoder_pallas.1} parent=1 // pred_region
      %38 = dma.done [#allocation5], 1920
    $region17: #{peneo_decoder_pallas.1} parent=1 // pred_fallthru
      _
    %v39 = vld [vmem:[#allocation2] sm:$0xff]
    %v40 = vld [vmem:[#allocation2 + $0x8] sm:$0xff]
    %v41 = vld [vmem:[#allocation4] sm:$0xff]
    %v42 = vld [vmem:[#allocation4 + $0x8] sm:$0xff]
    %v43 = vld [vmem:[#allocation4 + $0x10] sm:$0xff]
    %v44 = vld [vmem:[#allocation4 + $0x18] sm:$0xff]
    %v45 = vld [vmem:[#allocation4 + $0x20] sm:$0xff]
    %v46 = vld [vmem:[#allocation4 + $0x28] sm:$0xff]
    %v47 = vld [vmem:[#allocation4 + $0x30] sm:$0xff]
    %v48 = vld [vmem:[#allocation4 + $0x38] sm:$0xff]
    %v49 = vld [vmem:[#allocation4 + $0x40] sm:$0xff]
    %v50 = vld [vmem:[#allocation4 + $0x48] sm:$0xff]
    %v51 = vld [vmem:[#allocation4 + $0x50] sm:$0xff]
    %v52 = vld [vmem:[#allocation4 + $0x58] sm:$0xff]
    %v53 = vld [vmem:[#allocation4 + $0x60] sm:$0xff]
    %v54 = vld [vmem:[#allocation4 + $0x68] sm:$0xff]
    %v55 = vld [vmem:[#allocation4 + $0x70] sm:$0xff]
    %v56 = vlaneseq
    %v57 = vshrl.u32 %v56, 7
    %v58 = vsub.s32 0, %v57
    %v59 = vrot.slane %v55, %v58
    %vm60 = vcmask 392192
    %v62 = vsel %vm60, %v39, 0
    %v65 = vsel %vm60, %v40, 0
    %67 = vmatprep.subr.mxu0 0.0
    %68 = vmatpush1.msra.mxu0 %v41
    %69 = vmatprep.subr.mxu0 0.0
    %70 = vmatpush1.msra.mxu0 %v42
    %71 = vmatprep.subr.mxu0 0.0
    %72 = vmatpush1.msra.mxu0 %v43
    %73 = vmatprep.subr.mxu0 0.0
    %74 = vmatpush1.msra.mxu0 %v44
    %75 = vmatprep.subr.mxu0 0.0
    %76 = vmatpush1.msra.mxu0 %v45
    %77 = vmatprep.subr.mxu0 0.0
    %78 = vmatpush1.msra.mxu0 %v46
    %79 = vmatprep.subr.mxu0 0.0
    %80 = vmatpush1.msra.mxu0 0.0
    %81 = vmatprep.subr.mxu0 0.0
    %82 = vmatpush1.msra.mxu0 0.0
    %83 = vmatprep.subr.mxu0 0.0
    %84 = vmatpush1.msra.mxu0 0.0
    %85 = vmatprep.subr.mxu0 0.0
    %86 = vmatpush1.msra.mxu0 0.0
    %87 = vmatprep.subr.mxu0 0.0
    %88 = vmatpush1.msra.mxu0 0.0
    %89 = vmatprep.subr.mxu0 0.0
    %90 = vmatpush1.msra.mxu0 0.0
    %91 = vmatprep.subr.mxu0 0.0
    %92 = vmatpush1.msra.mxu0 0.0
    %93 = vmatprep.subr.mxu0 0.0
    %94 = vmatpush1.msra.mxu0 0.0
    %95 = vmatprep.subr.mxu0 0.0
    %96 = vmatpush1.msra.mxu0 0.0
    %97 = vmatprep.subr.mxu0 0.0
    %98 = vmatpush1.msra.mxu0 0.0
    %99 = vmatprep.subr.mxu0 0.0
    %100 = vmatpush1.msra.mxu0 0.0
    %101 = vmatprep.subr.mxu0 0.0
    %102 = vmatpush1.msra.mxu0 0.0
    %103 = vmatprep.subr.mxu0 0.0
    %104 = vmatpush1.msra.mxu0 0.0
    %105 = vmatprep.subr.mxu0 0.0
    %106 = vmatpush1.msra.mxu0 0.0
    %107 = vmatprep.subr.mxu0 0.0
    %108 = vmatpush1.msra.mxu0 0.0
    %109 = vmatprep.subr.mxu0 0.0
    %110 = vmatpush1.msra.mxu0 0.0
    %111 = vmatprep.subr.mxu0 0.0
    %112 = vmatpush1.msra.mxu0 0.0
    %113 = vmatprep.subr.mxu0 0.0
    %114 = vmatpush1.msra.mxu0 0.0
    %115 = vmatprep.subr.mxu0 0.0
    %116 = vmatpush1.msra.mxu0 0.0
    %117 = vmatprep.subr.mxu0 0.0
    %118 = vmatpush1.msra.mxu0 0.0
    %119 = vmatprep.subr.mxu0 0.0
    %120 = vmatpush1.msra.mxu0 0.0
    %121 = vmatprep.subr.mxu0 0.0
    %122 = vmatpush1.msra.mxu0 0.0
    %123 = vmatprep.subr.mxu0 0.0
    %124 = vmatpush1.msra.mxu0 0.0
    %125 = vmatprep.subr.mxu0 0.0
    %126 = vmatpush1.msra.mxu0 0.0
    %127 = vmatprep.subr.mxu0 0.0
    %128 = vmatpush1.msra.mxu0 0.0
    %129 = vmatprep.subr.mxu0 0.0
    %130 = vmatpush1.msra.mxu0 0.0
    %131 = vmatprep.mubr.f32.mxu0 0.0
    %132 = vmatmul.mubr.f32.gmra.mrb[0].mxu0 %v62
    %v133 = vpop.f32.mrb[0].mxu0
    %v134 = vadd.f32 %v59, %v133
    %v135 = vpop.f32.mrb[0].mxu0
    %136 = vmatprep.mubr.f32.mxu0 0.0
    %137 = vmatmul.mubr.f32.gmra.mrb[0].mxu0 %v65
    %v138 = vpop.f32.mrb[0].mxu0
    %v139 = vadd.f32 %v59, %v138
    %v140 = vpop.f32.mrb[0].mxu0
    %141 = vdwg.mxu0
    %v142 = vxor.u32 %v134, 2147483648
    %v143 = vxor.u32 %v139, 2147483648
    %v144 = vmul.f32 %v142, 1.442695
    %v145 = vpow.pop %v144
    %v146 = vmul.f32 %v143, 1.442695
    %v147 = vpow.pop %v146
    %v148 = vadd.f32 %v145, 1.0
    %v149 = vadd.f32 %v147, 1.0
    %v150 = vrcp.pop %v148
    %v151 = vmul.f32 1.0, %v150
    %v152 = vrcp.pop %v149
    %v153 = vmul.f32 1.0, %v152
    %v154 = vmul.f32 %v134, %v151
    %v155 = vmul.f32 %v139, %v153
    %v156 = vlaneseq
    %v157 = vshrl.u32 %v156, 7
    %v158 = vsub.s32 1, %v157
    %v159 = vrot.slane %v55, %v158
    %vm160 = vcmask 261120
    %v162 = vsel %vm160, %v154, 0
    %v165 = vsel %vm160, %v155, 0
    %167 = vmatprep.subr.mxu0 0.0
    %168 = vmatpush1.msra.mxu0 %v47
    %169 = vmatprep.subr.mxu0 0.0
    %170 = vmatpush1.msra.mxu0 %v48
    %171 = vmatprep.subr.mxu0 0.0
    %172 = vmatpush1.msra.mxu0 %v49
    %173 = vmatprep.subr.mxu0 0.0
    %174 = vmatpush1.msra.mxu0 %v50
    %175 = vmatprep.subr.mxu0 0.0
    %176 = vmatpush1.msra.mxu0 0.0
    %177 = vmatprep.subr.mxu0 0.0
    %178 = vmatpush1.msra.mxu0 0.0
    %179 = vmatprep.subr.mxu0 0.0
    %180 = vmatpush1.msra.mxu0 0.0
    %181 = vmatprep.subr.mxu0 0.0
    %182 = vmatpush1.msra.mxu0 0.0
    %183 = vmatprep.subr.mxu0 0.0
    %184 = vmatpush1.msra.mxu0 0.0
    %185 = vmatprep.subr.mxu0 0.0
    %186 = vmatpush1.msra.mxu0 0.0
    %187 = vmatprep.subr.mxu0 0.0
    %188 = vmatpush1.msra.mxu0 0.0
    %189 = vmatprep.subr.mxu0 0.0
    %190 = vmatpush1.msra.mxu0 0.0
    %191 = vmatprep.subr.mxu0 0.0
    %192 = vmatpush1.msra.mxu0 0.0
    %193 = vmatprep.subr.mxu0 0.0
    %194 = vmatpush1.msra.mxu0 0.0
    %195 = vmatprep.subr.mxu0 0.0
    %196 = vmatpush1.msra.mxu0 0.0
    %197 = vmatprep.subr.mxu0 0.0
    %198 = vmatpush1.msra.mxu0 0.0
    %199 = vmatprep.subr.mxu0 0.0
    %200 = vmatpush1.msra.mxu0 0.0
    %201 = vmatprep.subr.mxu0 0.0
    %202 = vmatpush1.msra.mxu0 0.0
    %203 = vmatprep.subr.mxu0 0.0
    %204 = vmatpush1.msra.mxu0 0.0
    %205 = vmatprep.subr.mxu0 0.0
    %206 = vmatpush1.msra.mxu0 0.0
    %207 = vmatprep.subr.mxu0 0.0
    %208 = vmatpush1.msra.mxu0 0.0
    %209 = vmatprep.subr.mxu0 0.0
    %210 = vmatpush1.msra.mxu0 0.0
    %211 = vmatprep.subr.mxu0 0.0
    %212 = vmatpush1.msra.mxu0 0.0
    %213 = vmatprep.subr.mxu0 0.0
    %214 = vmatpush1.msra.mxu0 0.0
    %215 = vmatprep.subr.mxu0 0.0
    %216 = vmatpush1.msra.mxu0 0.0
    %217 = vmatprep.subr.mxu0 0.0
    %218 = vmatpush1.msra.mxu0 0.0
    %219 = vmatprep.subr.mxu0 0.0
    %220 = vmatpush1.msra.mxu0 0.0
    %221 = vmatprep.subr.mxu0 0.0
    %222 = vmatpush1.msra.mxu0 0.0
    %223 = vmatprep.subr.mxu0 0.0
    %224 = vmatpush1.msra.mxu0 0.0
    %225 = vmatprep.subr.mxu0 0.0
    %226 = vmatpush1.msra.mxu0 0.0
    %227 = vmatprep.subr.mxu0 0.0
    %228 = vmatpush1.msra.mxu0 0.0
    %229 = vmatprep.subr.mxu0 0.0
    %230 = vmatpush1.msra.mxu0 0.0
    %231 = vmatprep.mubr.f32.mxu0 0.0
    %232 = vmatmul.mubr.f32.gmra.mrb[0].mxu0 %v162
    %v233 = vpop.f32.mrb[0].mxu0
    %v234 = vadd.f32 %v159, %v233
    %v235 = vpop.f32.mrb[0].mxu0
    %236 = vmatprep.mubr.f32.mxu0 0.0
    %237 = vmatmul.mubr.f32.gmra.mrb[0].mxu0 %v165
    %v238 = vpop.f32.mrb[0].mxu0
    %v239 = vadd.f32 %v159, %v238
    %v240 = vpop.f32.mrb[0].mxu0
    %241 = vdwg.mxu0
    %v242 = vxor.u32 %v234, 2147483648
    %v243 = vxor.u32 %v239, 2147483648
    %v244 = vmul.f32 %v242, 1.442695
    %v245 = vpow.pop %v244
    %v246 = vmul.f32 %v243, 1.442695
    %v247 = vpow.pop %v246
    %v248 = vadd.f32 %v245, 1.0
    %v249 = vadd.f32 %v247, 1.0
    %v250 = vrcp.pop %v248
    %v251 = vmul.f32 1.0, %v250
    %v252 = vrcp.pop %v249
    %v253 = vmul.f32 1.0, %v252
    %v254 = vmul.f32 %v234, %v251
    %v255 = vmul.f32 %v239, %v253
    %vm256 = vcmask 130048
    %v258 = vsel %vm256, %v254, 0
    %v261 = vsel %vm256, %v255, 0
    %263 = vmatprep.subr.mxu0 0.0
    %264 = vmatpush1.msra.mxu0 %v51
    %265 = vmatprep.subr.mxu0 0.0
    %266 = vmatpush1.msra.mxu0 %v52
    %267 = vmatprep.subr.mxu0 0.0
    %268 = vmatpush1.msra.mxu0 0.0
    %269 = vmatprep.subr.mxu0 0.0
    %270 = vmatpush1.msra.mxu0 0.0
    %271 = vmatprep.subr.mxu0 0.0
    %272 = vmatpush1.msra.mxu0 0.0
    %273 = vmatprep.subr.mxu0 0.0
    %274 = vmatpush1.msra.mxu0 0.0
    %275 = vmatprep.subr.mxu0 0.0
    %276 = vmatpush1.msra.mxu0 0.0
    %277 = vmatprep.subr.mxu0 0.0
    %278 = vmatpush1.msra.mxu0 0.0
    %279 = vmatprep.subr.mxu0 0.0
    %280 = vmatpush1.msra.mxu0 0.0
    %281 = vmatprep.subr.mxu0 0.0
    %282 = vmatpush1.msra.mxu0 0.0
    %283 = vmatprep.subr.mxu0 0.0
    %284 = vmatpush1.msra.mxu0 0.0
    %285 = vmatprep.subr.mxu0 0.0
    %286 = vmatpush1.msra.mxu0 0.0
    %287 = vmatprep.subr.mxu0 0.0
    %288 = vmatpush1.msra.mxu0 0.0
    %289 = vmatprep.subr.mxu0 0.0
    %290 = vmatpush1.msra.mxu0 0.0
    %291 = vmatprep.subr.mxu0 0.0
    %292 = vmatpush1.msra.mxu0 0.0
    %293 = vmatprep.subr.mxu0 0.0
    %294 = vmatpush1.msra.mxu0 0.0
    %295 = vmatprep.subr.mxu0 0.0
    %296 = vmatpush1.msra.mxu0 0.0
    %297 = vmatprep.subr.mxu0 0.0
    %298 = vmatpush1.msra.mxu0 0.0
    %299 = vmatprep.subr.mxu0 0.0
    %300 = vmatpush1.msra.mxu0 0.0
    %301 = vmatprep.subr.mxu0 0.0
    %302 = vmatpush1.msra.mxu0 0.0
    %303 = vmatprep.subr.mxu0 0.0
    %304 = vmatpush1.msra.mxu0 0.0
    %305 = vmatprep.subr.mxu0 0.0
    %306 = vmatpush1.msra.mxu0 0.0
    %307 = vmatprep.subr.mxu0 0.0
    %308 = vmatpush1.msra.mxu0 0.0
    %309 = vmatprep.subr.mxu0 0.0
    %310 = vmatpush1.msra.mxu0 0.0
    %311 = vmatprep.subr.mxu0 0.0
    %312 = vmatpush1.msra.mxu0 0.0
    %313 = vmatprep.subr.mxu0 0.0
    %314 = vmatpush1.msra.mxu0 0.0
    %315 = vmatprep.subr.mxu0 0.0
    %316 = vmatpush1.msra.mxu0 0.0
    %317 = vmatprep.subr.mxu0 0.0
    %318 = vmatpush1.msra.mxu0 0.0
    %319 = vmatprep.subr.mxu0 0.0
    %320 = vmatpush1.msra.mxu0 0.0
    %321 = vmatprep.subr.mxu0 0.0
    %322 = vmatpush1.msra.mxu0 0.0
    %323 = vmatprep.subr.mxu0 0.0
    %324 = vmatpush1.msra.mxu0 0.0
    %325 = vmatprep.subr.mxu0 0.0
    %326 = vmatpush1.msra.mxu0 0.0
    %327 = vmatprep.mubr.f32.mxu0 0.0
    %328 = vmatmul.mubr.f32.gmra.mrb[0].mxu0 %v258
    %v329 = vpop.f32.mrb[0].mxu0
    %v330 = vadd.f32 0.0, %v329
    %v331 = vpop.f32.mrb[0].mxu0
    %332 = vmatprep.mubr.f32.mxu0 0.0
    %333 = vmatmul.mubr.f32.gmra.mrb[0].mxu0 %v261
    %v334 = vpop.f32.mrb[0].mxu0
    %v335 = vadd.f32 0.0, %v334
    %v336 = vpop.f32.mrb[0].mxu0
    %337 = vdwg.mxu0
    %v338 = vlaneseq
    %v339 = vshrl.u32 %v338, 7
    %v340 = vsub.s32 2, %v339
    %v341 = vrot.slane %v55, %v340
    %343 = vrot.lane.b32.xlu0 %v341, 16
    %v344 = vpop.permute.xlu0 %343
    %v346 = vadd.f32 %v330, %v344
    %v347 = vadd.f32 %v335, %v344
    %v350 = vcombine.high %v330, %v330
    %v352 = vunpack.c.l.s4 1966171168
    %v353 = vunpack.c.0.s8 %v352
    %v354 = vlaneseq
    %v355 = vshrl.u32 %v354, 7
    %v356 = vsub.s32 %v353, %v355
    %v357 = vrot.slane %v330, %v356
    %v359 = vunpack.c.l.s4 1966171168
    %v360 = vunpack.c.0.s8 %v359
    %v361 = vlaneseq
    %v362 = vshrl.u32 %v361, 7
    %v363 = vsub.s32 %v360, %v362
    %v364 = vrot.slane %v350, %v363
    %v365 = vcombine.high %v357, %v357
    %v366 = vcombine.high %v364, %v364
    %v368 = vunpack.c.l.s4 1966171168
    %v369 = vunpack.c.0.s8 %v368
    %v370 = vlaneseq
    %v371 = vshrl.u32 %v370, 7
    %v372 = vsub.s32 %v369, %v371
    %v373 = vrot.slane %v357, %v372
    %v375 = vunpack.c.l.s4 1966171168
    %v376 = vunpack.c.0.s8 %v375
    %v377 = vlaneseq
    %v378 = vshrl.u32 %v377, 7
    %v379 = vsub.s32 %v376, %v378
    %v380 = vrot.slane %v364, %v379
    %v382 = vunpack.c.l.s4 1966171168
    %v383 = vunpack.c.0.s8 %v382
    %v384 = vlaneseq
    %v385 = vshrl.u32 %v384, 7
    %v386 = vsub.s32 %v383, %v385
    %v387 = vrot.slane %v365, %v386
    %v389 = vunpack.c.l.s4 1966171168
    %v390 = vunpack.c.0.s8 %v389
    %v391 = vlaneseq
    %v392 = vshrl.u32 %v391, 7
    %v393 = vsub.s32 %v390, %v392
    %v394 = vrot.slane %v366, %v393
    %v395 = vcombine.high %v373, %v373
    %v396 = vcombine.high %v380, %v380
    %v397 = vcombine.high %v387, %v387
    %v398 = vcombine.high %v394, %v394
    %v399 = vcombine.high %v335, %v335
    %v401 = vunpack.c.l.s4 1966171168
    %v402 = vunpack.c.0.s8 %v401
    %v403 = vlaneseq
    %v404 = vshrl.u32 %v403, 7
    %v405 = vsub.s32 %v402, %v404
    %v406 = vrot.slane %v335, %v405
    %v408 = vunpack.c.l.s4 1966171168
    %v409 = vunpack.c.0.s8 %v408
    %v410 = vlaneseq
    %v411 = vshrl.u32 %v410, 7
    %v412 = vsub.s32 %v409, %v411
    %v413 = vrot.slane %v399, %v412
    %v414 = vcombine.high %v406, %v406
    %v415 = vcombine.high %v413, %v413
    %v417 = vunpack.c.l.s4 1966171168
    %v418 = vunpack.c.0.s8 %v417
    %v419 = vlaneseq
    %v420 = vshrl.u32 %v419, 7
    %v421 = vsub.s32 %v418, %v420
    %v422 = vrot.slane %v406, %v421
    %v424 = vunpack.c.l.s4 1966171168
    %v425 = vunpack.c.0.s8 %v424
    %v426 = vlaneseq
    %v427 = vshrl.u32 %v426, 7
    %v428 = vsub.s32 %v425, %v427
    %v429 = vrot.slane %v413, %v428
    %v431 = vunpack.c.l.s4 1966171168
    %v432 = vunpack.c.0.s8 %v431
    %v433 = vlaneseq
    %v434 = vshrl.u32 %v433, 7
    %v435 = vsub.s32 %v432, %v434
    %v436 = vrot.slane %v414, %v435
    %v438 = vunpack.c.l.s4 1966171168
    %v439 = vunpack.c.0.s8 %v438
    %v440 = vlaneseq
    %v441 = vshrl.u32 %v440, 7
    %v442 = vsub.s32 %v439, %v441
    %v443 = vrot.slane %v415, %v442
    %v444 = vcombine.high %v422, %v422
    %v445 = vcombine.high %v429, %v429
    %v446 = vcombine.high %v436, %v436
    %v447 = vcombine.high %v443, %v443
    %v448 = vlaneseq
    %v449 = vshrl.u32 %v448, 7
    %v450 = vsub.s32 0, %v449
    %v451 = vrot.slane %v373, %v450
    %v452 = vlaneseq
    %v453 = vshrl.u32 %v452, 7
    %v454 = vsub.s32 0, %v453
    %v455 = vrot.slane %v387, %v454
    %v456 = vlaneseq
    %v457 = vshrl.u32 %v456, 7
    %v458 = vsub.s32 0, %v457
    %v459 = vrot.slane %v395, %v458
    %v460 = vlaneseq
    %v461 = vshrl.u32 %v460, 7
    %v462 = vsub.s32 0, %v461
    %v463 = vrot.slane %v397, %v462
    %v464 = vlaneseq
    %v465 = vshrl.u32 %v464, 7
    %v466 = vsub.s32 0, %v465
    %v467 = vrot.slane %v380, %v466
    %v468 = vlaneseq
    %v469 = vshrl.u32 %v468, 7
    %v470 = vsub.s32 0, %v469
    %v471 = vrot.slane %v394, %v470
    %v472 = vlaneseq
    %v473 = vshrl.u32 %v472, 7
    %v474 = vsub.s32 0, %v473
    %v475 = vrot.slane %v396, %v474
    %v476 = vlaneseq
    %v477 = vshrl.u32 %v476, 7
    %v478 = vsub.s32 0, %v477
    %v479 = vrot.slane %v398, %v478
    %v480 = vlaneseq
    %v481 = vshrl.u32 %v480, 7
    %v482 = vsub.s32 0, %v481
    %v483 = vrot.slane %v422, %v482
    %v484 = vlaneseq
    %v485 = vshrl.u32 %v484, 7
    %v486 = vsub.s32 0, %v485
    %v487 = vrot.slane %v436, %v486
    %v488 = vlaneseq
    %v489 = vshrl.u32 %v488, 7
    %v490 = vsub.s32 0, %v489
    %v491 = vrot.slane %v444, %v490
    %v492 = vlaneseq
    %v493 = vshrl.u32 %v492, 7
    %v494 = vsub.s32 0, %v493
    %v495 = vrot.slane %v446, %v494
    %v496 = vlaneseq
    %v497 = vshrl.u32 %v496, 7
    %v498 = vsub.s32 0, %v497
    %v499 = vrot.slane %v429, %v498
    %v500 = vlaneseq
    %v501 = vshrl.u32 %v500, 7
    %v502 = vsub.s32 0, %v501
    %v503 = vrot.slane %v443, %v502
    %v504 = vlaneseq
    %v505 = vshrl.u32 %v504, 7
    %v506 = vsub.s32 0, %v505
    %v507 = vrot.slane %v445, %v506
    %v508 = vlaneseq
    %v509 = vshrl.u32 %v508, 7
    %v510 = vsub.s32 0, %v509
    %v511 = vrot.slane %v447, %v510
    %530 = vrot.lane.b32.xlu0 %v346, 112
    %v531 = vpop.permute.xlu0 %530
    %532 = vrot.lane.b32.xlu0 %v347, 112
    %v533 = vpop.permute.xlu0 %532
    %v536 = vadd.f32 %v451, %v531
    %v537 = vadd.f32 %v455, %v531
    %v538 = vadd.f32 %v459, %v531
    %v539 = vadd.f32 %v463, %v531
    %v540 = vadd.f32 %v467, %v531
    %v541 = vadd.f32 %v471, %v531
    %v542 = vadd.f32 %v475, %v531
    %v543 = vadd.f32 %v479, %v531
    %v544 = vadd.f32 %v483, %v533
    %v545 = vadd.f32 %v487, %v533
    %v546 = vadd.f32 %v491, %v533
    %v547 = vadd.f32 %v495, %v533
    %v548 = vadd.f32 %v499, %v533
    %v549 = vadd.f32 %v503, %v533
    %v550 = vadd.f32 %v507, %v533
    %v551 = vadd.f32 %v511, %v533
    %v552 = vxor.u32 %v536, 2147483648
    %v553 = vxor.u32 %v537, 2147483648
    %v554 = vxor.u32 %v538, 2147483648
    %v555 = vxor.u32 %v539, 2147483648
    %v556 = vxor.u32 %v540, 2147483648
    %v557 = vxor.u32 %v541, 2147483648
    %v558 = vxor.u32 %v542, 2147483648
    %v559 = vxor.u32 %v543, 2147483648
    %v560 = vxor.u32 %v544, 2147483648
    %v561 = vxor.u32 %v545, 2147483648
    %v562 = vxor.u32 %v546, 2147483648
    %v563 = vxor.u32 %v547, 2147483648
    %v564 = vxor.u32 %v548, 2147483648
    %v565 = vxor.u32 %v549, 2147483648
    %v566 = vxor.u32 %v550, 2147483648
    %v567 = vxor.u32 %v551, 2147483648
    %v568 = vmul.f32 %v552, 1.442695
    %v569 = vpow.pop %v568
    %v570 = vmul.f32 %v553, 1.442695
    %v571 = vpow.pop %v570
    %v572 = vmul.f32 %v554, 1.442695
    %v573 = vpow.pop %v572
    %v574 = vmul.f32 %v555, 1.442695
    %v575 = vpow.pop %v574
    %v576 = vmul.f32 %v556, 1.442695
    %v577 = vpow.pop %v576
    %v578 = vmul.f32 %v557, 1.442695
    %v579 = vpow.pop %v578
    %v580 = vmul.f32 %v558, 1.442695
    %v581 = vpow.pop %v580
    %v582 = vmul.f32 %v559, 1.442695
    %v583 = vpow.pop %v582
    %v584 = vmul.f32 %v560, 1.442695
    %v585 = vpow.pop %v584
    %v586 = vmul.f32 %v561, 1.442695
    %v587 = vpow.pop %v586
    %v588 = vmul.f32 %v562, 1.442695
    %v589 = vpow.pop %v588
    %v590 = vmul.f32 %v563, 1.442695
    %v591 = vpow.pop %v590
    %v592 = vmul.f32 %v564, 1.442695
    %v593 = vpow.pop %v592
    %v594 = vmul.f32 %v565, 1.442695
    %v595 = vpow.pop %v594
    %v596 = vmul.f32 %v566, 1.442695
    %v597 = vpow.pop %v596
    %v598 = vmul.f32 %v567, 1.442695
    %v599 = vpow.pop %v598
    %v600 = vadd.f32 %v569, 1.0
    %v601 = vadd.f32 %v571, 1.0
    %v602 = vadd.f32 %v573, 1.0
    %v603 = vadd.f32 %v575, 1.0
    %v604 = vadd.f32 %v577, 1.0
    %v605 = vadd.f32 %v579, 1.0
    %v606 = vadd.f32 %v581, 1.0
    %v607 = vadd.f32 %v583, 1.0
    %v608 = vadd.f32 %v585, 1.0
    %v609 = vadd.f32 %v587, 1.0
    %v610 = vadd.f32 %v589, 1.0
    %v611 = vadd.f32 %v591, 1.0
    %v612 = vadd.f32 %v593, 1.0
    %v613 = vadd.f32 %v595, 1.0
    %v614 = vadd.f32 %v597, 1.0
    %v615 = vadd.f32 %v599, 1.0
    %v616 = vrcp.pop %v600
    %v617 = vmul.f32 1.0, %v616
    %v618 = vrcp.pop %v601
    %v619 = vmul.f32 1.0, %v618
    %v620 = vrcp.pop %v602
    %v621 = vmul.f32 1.0, %v620
    %v622 = vrcp.pop %v603
    %v623 = vmul.f32 1.0, %v622
    %v624 = vrcp.pop %v604
    %v625 = vmul.f32 1.0, %v624
    %v626 = vrcp.pop %v605
    %v627 = vmul.f32 1.0, %v626
    %v628 = vrcp.pop %v606
    %v629 = vmul.f32 1.0, %v628
    %v630 = vrcp.pop %v607
    %v631 = vmul.f32 1.0, %v630
    %v632 = vrcp.pop %v608
    %v633 = vmul.f32 1.0, %v632
    %v634 = vrcp.pop %v609
    %v635 = vmul.f32 1.0, %v634
    %v636 = vrcp.pop %v610
    %v637 = vmul.f32 1.0, %v636
    %v638 = vrcp.pop %v611
    %v639 = vmul.f32 1.0, %v638
    %v640 = vrcp.pop %v612
    %v641 = vmul.f32 1.0, %v640
    %v642 = vrcp.pop %v613
    %v643 = vmul.f32 1.0, %v642
    %v644 = vrcp.pop %v614
    %v645 = vmul.f32 1.0, %v644
    %v646 = vrcp.pop %v615
    %v647 = vmul.f32 1.0, %v646
    %v648 = vmul.f32 %v536, %v617
    %v649 = vmul.f32 %v537, %v619
    %v650 = vmul.f32 %v538, %v621
    %v651 = vmul.f32 %v539, %v623
    %v652 = vmul.f32 %v540, %v625
    %v653 = vmul.f32 %v541, %v627
    %v654 = vmul.f32 %v542, %v629
    %v655 = vmul.f32 %v543, %v631
    %v656 = vmul.f32 %v544, %v633
    %v657 = vmul.f32 %v545, %v635
    %v658 = vmul.f32 %v546, %v637
    %v659 = vmul.f32 %v547, %v639
    %v660 = vmul.f32 %v548, %v641
    %v661 = vmul.f32 %v549, %v643
    %v662 = vmul.f32 %v550, %v645
    %v663 = vmul.f32 %v551, %v647
    %v664 = vlaneseq
    %v665 = vshrl.u32 %v664, 7
    %v666 = vsub.s32 3, %v665
    %v667 = vrot.slane %v55, %v666
    %v669 = vsel %vm256, %v648, 0
    %v672 = vsel %vm256, %v649, 0
    %v675 = vsel %vm256, %v650, 0
    %v678 = vsel %vm256, %v651, 0
    %v681 = vsel %vm256, %v652, 0
    %v684 = vsel %vm256, %v653, 0
    %v687 = vsel %vm256, %v654, 0
    %v690 = vsel %vm256, %v655, 0
    %v693 = vsel %vm256, %v656, 0
    %v696 = vsel %vm256, %v657, 0
    %v699 = vsel %vm256, %v658, 0
    %v702 = vsel %vm256, %v659, 0
    %v705 = vsel %vm256, %v660, 0
    %v708 = vsel %vm256, %v661, 0
    %v711 = vsel %vm256, %v662, 0
    %v714 = vsel %vm256, %v663, 0
    %716 = vmatprep.subr.mxu0 0.0
    %717 = vmatpush1.msra.mxu0 %v53
    %718 = vmatprep.subr.mxu0 0.0
    %719 = vmatpush1.msra.mxu0 %v54
    %720 = vmatprep.subr.mxu0 0.0
    %721 = vmatpush1.msra.mxu0 0.0
    %722 = vmatprep.subr.mxu0 0.0
    %723 = vmatpush1.msra.mxu0 0.0
    %724 = vmatprep.subr.mxu0 0.0
    %725 = vmatpush1.msra.mxu0 0.0
    %726 = vmatprep.subr.mxu0 0.0
    %727 = vmatpush1.msra.mxu0 0.0
    %728 = vmatprep.subr.mxu0 0.0
    %729 = vmatpush1.msra.mxu0 0.0
    %730 = vmatprep.subr.mxu0 0.0
    %731 = vmatpush1.msra.mxu0 0.0
    %732 = vmatprep.subr.mxu0 0.0
    %733 = vmatpush1.msra.mxu0 0.0
    %734 = vmatprep.subr.mxu0 0.0
    %735 = vmatpush1.msra.mxu0 0.0
    %736 = vmatprep.subr.mxu0 0.0
    %737 = vmatpush1.msra.mxu0 0.0
    %738 = vmatprep.subr.mxu0 0.0
    %739 = vmatpush1.msra.mxu0 0.0
    %740 = vmatprep.subr.mxu0 0.0
    %741 = vmatpush1.msra.mxu0 0.0
    %742 = vmatprep.subr.mxu0 0.0
    %743 = vmatpush1.msra.mxu0 0.0
    %744 = vmatprep.subr.mxu0 0.0
    %745 = vmatpush1.msra.mxu0 0.0
    %746 = vmatprep.subr.mxu0 0.0
    %747 = vmatpush1.msra.mxu0 0.0
    %748 = vmatprep.subr.mxu0 0.0
    %749 = vmatpush1.msra.mxu0 0.0
    %750 = vmatprep.subr.mxu0 0.0
    %751 = vmatpush1.msra.mxu0 0.0
    %752 = vmatprep.subr.mxu0 0.0
    %753 = vmatpush1.msra.mxu0 0.0
    %754 = vmatprep.subr.mxu0 0.0
    %755 = vmatpush1.msra.mxu0 0.0
    %756 = vmatprep.subr.mxu0 0.0
    %757 = vmatpush1.msra.mxu0 0.0
    %758 = vmatprep.subr.mxu0 0.0
    %759 = vmatpush1.msra.mxu0 0.0
    %760 = vmatprep.subr.mxu0 0.0
    %761 = vmatpush1.msra.mxu0 0.0
    %762 = vmatprep.subr.mxu0 0.0
    %763 = vmatpush1.msra.mxu0 0.0
    %764 = vmatprep.subr.mxu0 0.0
    %765 = vmatpush1.msra.mxu0 0.0
    %766 = vmatprep.subr.mxu0 0.0
    %767 = vmatpush1.msra.mxu0 0.0
    %768 = vmatprep.subr.mxu0 0.0
    %769 = vmatpush1.msra.mxu0 0.0
    %770 = vmatprep.subr.mxu0 0.0
    %771 = vmatpush1.msra.mxu0 0.0
    %772 = vmatprep.subr.mxu0 0.0
    %773 = vmatpush1.msra.mxu0 0.0
    %774 = vmatprep.subr.mxu0 0.0
    %775 = vmatpush1.msra.mxu0 0.0
    %776 = vmatprep.subr.mxu0 0.0
    %777 = vmatpush1.msra.mxu0 0.0
    %778 = vmatprep.subr.mxu0 0.0
    %779 = vmatpush1.msra.mxu0 0.0
    %780 = vmatprep.mubr.f32.mxu0 0.0
    %781 = vmatmul.mubr.f32.gmra.mrb[0].mxu0 %v669
    %v782 = vpop.f32.mrb[0].mxu0
    %v783 = vadd.f32 %v667, %v782
    %v784 = vpop.f32.mrb[0].mxu0
    %785 = vmatprep.mubr.f32.mxu0 0.0
    %786 = vmatmul.mubr.f32.gmra.mrb[0].mxu0 %v672
    %v787 = vpop.f32.mrb[0].mxu0
    %v788 = vadd.f32 %v667, %v787
    %v789 = vpop.f32.mrb[0].mxu0
    %790 = vmatprep.mubr.f32.mxu0 0.0
    %791 = vmatmul.mubr.f32.gmra.mrb[0].mxu0 %v675
    %v792 = vpop.f32.mrb[0].mxu0
    %v793 = vadd.f32 %v667, %v792
    %v794 = vpop.f32.mrb[0].mxu0
    %795 = vmatprep.mubr.f32.mxu0 0.0
    %796 = vmatmul.mubr.f32.gmra.mrb[0].mxu0 %v678
    %v797 = vpop.f32.mrb[0].mxu0
    %v798 = vadd.f32 %v667, %v797
    %v799 = vpop.f32.mrb[0].mxu0
    %800 = vmatprep.mubr.f32.mxu0 0.0
    %801 = vmatmul.mubr.f32.gmra.mrb[0].mxu0 %v681
    %v802 = vpop.f32.mrb[0].mxu0
    %v803 = vadd.f32 %v667, %v802
    %v804 = vpop.f32.mrb[0].mxu0
    %805 = vmatprep.mubr.f32.mxu0 0.0
    %806 = vmatmul.mubr.f32.gmra.mrb[0].mxu0 %v684
    %v807 = vpop.f32.mrb[0].mxu0
    %v808 = vadd.f32 %v667, %v807
    %v809 = vpop.f32.mrb[0].mxu0
    %810 = vmatprep.mubr.f32.mxu0 0.0
    %811 = vmatmul.mubr.f32.gmra.mrb[0].mxu0 %v687
    %v812 = vpop.f32.mrb[0].mxu0
    %v813 = vadd.f32 %v667, %v812
    %v814 = vpop.f32.mrb[0].mxu0
    %815 = vmatprep.mubr.f32.mxu0 0.0
    %816 = vmatmul.mubr.f32.gmra.mrb[0].mxu0 %v690
    %v817 = vpop.f32.mrb[0].mxu0
    %v818 = vadd.f32 %v667, %v817
    %v819 = vpop.f32.mrb[0].mxu0
    %820 = vmatprep.mubr.f32.mxu0 0.0
    %821 = vmatmul.mubr.f32.gmra.mrb[0].mxu0 %v693
    %v822 = vpop.f32.mrb[0].mxu0
    %v823 = vadd.f32 %v667, %v822
    %v824 = vpop.f32.mrb[0].mxu0
    %825 = vmatprep.mubr.f32.mxu0 0.0
    %826 = vmatmul.mubr.f32.gmra.mrb[0].mxu0 %v696
    %v827 = vpop.f32.mrb[0].mxu0
    %v828 = vadd.f32 %v667, %v827
    %v829 = vpop.f32.mrb[0].mxu0
    %830 = vmatprep.mubr.f32.mxu0 0.0
    %831 = vmatmul.mubr.f32.gmra.mrb[0].mxu0 %v699
    %v832 = vpop.f32.mrb[0].mxu0
    %v833 = vadd.f32 %v667, %v832
    %v834 = vpop.f32.mrb[0].mxu0
    %835 = vmatprep.mubr.f32.mxu0 0.0
    %836 = vmatmul.mubr.f32.gmra.mrb[0].mxu0 %v702
    %v837 = vpop.f32.mrb[0].mxu0
    %v838 = vadd.f32 %v667, %v837
    %v839 = vpop.f32.mrb[0].mxu0
    %840 = vmatprep.mubr.f32.mxu0 0.0
    %841 = vmatmul.mubr.f32.gmra.mrb[0].mxu0 %v705
    %v842 = vpop.f32.mrb[0].mxu0
    %v843 = vadd.f32 %v667, %v842
    %v844 = vpop.f32.mrb[0].mxu0
    %845 = vmatprep.mubr.f32.mxu0 0.0
    %846 = vmatmul.mubr.f32.gmra.mrb[0].mxu0 %v708
    %v847 = vpop.f32.mrb[0].mxu0
    %v848 = vadd.f32 %v667, %v847
    %v849 = vpop.f32.mrb[0].mxu0
    %850 = vmatprep.mubr.f32.mxu0 0.0
    %851 = vmatmul.mubr.f32.gmra.mrb[0].mxu0 %v711
    %v852 = vpop.f32.mrb[0].mxu0
    %v853 = vadd.f32 %v667, %v852
    %v854 = vpop.f32.mrb[0].mxu0
    %855 = vmatprep.mubr.f32.mxu0 0.0
    %856 = vmatmul.mubr.f32.gmra.mrb[0].mxu0 %v714
    %v857 = vpop.f32.mrb[0].mxu0
    %v858 = vadd.f32 %v667, %v857
    %v859 = vpop.f32.mrb[0].mxu0
    %860 = vdwg.mxu0
    %861 = vst [vmem:[%s2] sm:$0xff] %v783
    %862 = vst [vmem:[%s2 + $0x8] sm:$0xff] %v788
    %863 = vst [vmem:[%s2 + $0x10] sm:$0xff] %v793
    %864 = vst [vmem:[%s2 + $0x18] sm:$0xff] %v798
    %865 = vst [vmem:[%s2 + $0x20] sm:$0xff] %v803
    %866 = vst [vmem:[%s2 + $0x28] sm:$0xff] %v808
    %867 = vst [vmem:[%s2 + $0x30] sm:$0xff] %v813
    %868 = vst [vmem:[%s2 + $0x38] sm:$0xff] %v818
    %869 = vst [vmem:[%s2 + $0x40] sm:$0xff] %v823
    %870 = vst [vmem:[%s2 + $0x48] sm:$0xff] %v828
    %871 = vst [vmem:[%s2 + $0x50] sm:$0xff] %v833
    %872 = vst [vmem:[%s2 + $0x58] sm:$0xff] %v838
    %873 = vst [vmem:[%s2 + $0x60] sm:$0xff] %v843
    %874 = vst [vmem:[%s2 + $0x68] sm:$0xff] %v848
    %875 = vst [vmem:[%s2 + $0x70] sm:$0xff] %v853
    %876 = vst [vmem:[%s2 + $0x78] sm:$0xff] %v858
    // Predicated region
    $region18: #{peneo_decoder_pallas.1} parent=1 // pred_check
      _
    $region19: #{peneo_decoder_pallas.1} parent=1 // pred_check_branch
      %878 = sbr.rel (0) target = $region21
    $region20: #{peneo_decoder_pallas.1} parent=1 // pred_region
      _
    $region21: #{peneo_decoder_pallas.1} parent=1 // pred_fallthru
      _
    // Predicated region
    $region22: #{peneo_decoder_pallas.1} parent=1 // pred_check
      _
    $region23: #{peneo_decoder_pallas.1} parent=1 // pred_check_branch
      %880 = sbr.rel (0) target = $region25
    $region24: #{peneo_decoder_pallas.1} parent=1 // pred_region
      _
    $region25: #{peneo_decoder_pallas.1} parent=1 // pred_fallthru
      _
    %881 = vsyncpa [#allocation3], 1
    %882 = vsyncpa [#allocation5], 1

// kernel: split.0
$region0: #{split.0}
  #allocation0 [shape = 'u32[2048]{0}', space=vmem, size = 0x2000, scoped, tag = 'scoped memory for split.0']
  #allocation1 [shape = 'u32[2048]{0}', space=vmem, size = 0x2000, scoped, tag = 'scoped memory for split.0']
  #allocation2 [shape = 'u32[2048]{0}', space=vmem, size = 0x2000, scoped, tag = 'scoped memory for split.0']
  #allocation3 [shape = 'u32[2048]{0}', space=vmem, size = 0x2000, scoped, tag = 'scoped memory for split.0']
  #allocation4 [shape = 'u32[2048]{0}', space=vmem, size = 0x2000, scoped, tag = 'scoped memory for split.0']
  #allocation5 [shape = 's32[1]{0}', space=sflag, size = 0x4, scoped, tag = 'scoped memory for split.0']
  %s0 = inlined_call_operand.vmem [shape: f32[2,36,14], index: 0, kind: input, shape index: {}]
  %s1 = inlined_call_operand.vmem [shape: f32[2,36,2], index: 1, kind: output, shape index: {}]
  %v2 = vld [vmem:[%s0] sm:$0xff]
  %3 = vst [vmem:[%s1] sm:$0xff] %v2
  %s4 = scalar_lea.vmem %s0, 40
  %v5 = vld [vmem:[%s4] sm:$0xff]
  %s6 = scalar_lea.vmem %s1, 40
  %7 = vst [vmem:[%s6] sm:$0xff] %v5
  %s8 = scalar_lea.vmem %s0, 8
  %v9 = vld [vmem:[%s8] sm:$0xff]
  %s10 = scalar_lea.vmem %s1, 8
  %11 = vst [vmem:[%s10] sm:$0xff] %v9
  %s12 = scalar_lea.vmem %s0, 48
  %v13 = vld [vmem:[%s12] sm:$0xff]
  %s14 = scalar_lea.vmem %s1, 48
  %15 = vst [vmem:[%s14] sm:$0xff] %v13
  %s16 = scalar_lea.vmem %s0, 16
  %v17 = vld [vmem:[%s16] sm:$0xff]
  %s18 = scalar_lea.vmem %s1, 16
  %19 = vst [vmem:[%s18] sm:$0xff] %v17
  %s20 = scalar_lea.vmem %s0, 56
  %v21 = vld [vmem:[%s20] sm:$0xff]
  %s22 = scalar_lea.vmem %s1, 56
  %23 = vst [vmem:[%s22] sm:$0xff] %v21
  %s24 = scalar_lea.vmem %s0, 24
  %v25 = vld [vmem:[%s24] sm:$0xff]
  %s26 = scalar_lea.vmem %s1, 24
  %27 = vst [vmem:[%s26] sm:$0xff] %v25
  %s28 = scalar_lea.vmem %s0, 64
  %v29 = vld [vmem:[%s28] sm:$0xff]
  %s30 = scalar_lea.vmem %s1, 64
  %31 = vst [vmem:[%s30] sm:$0xff] %v29
  %s32 = scalar_lea.vmem %s0, 32
  %v33 = vld [vmem:[%s32] sm:$0xff]
  %s34 = scalar_lea.vmem %s1, 32
  %35 = vst [vmem:[%s34] sm:$0xff] %v33
  %s36 = scalar_lea.vmem %s0, 72
  %v37 = vld [vmem:[%s36] sm:$0xff]
  %s38 = scalar_lea.vmem %s1, 72
  %39 = vst [vmem:[%s38] sm:$0xff] %v37

</llo_original>
